<compile_context>
chip_gen: v5e
topology: v5e:2x2
jax: 0.10.0
libtpu: 0.0.40
codegen_flags: <defaults>
</compile_context>

<pallas_src>
import functools
import numpy as np
import jax
import jax.numpy as jnp
from jax import lax
from jax.experimental import pallas as pl
from jax.experimental.pallas import tpu as pltpu

PSP_SIZES = (1, 3, 6, 8)          # -> S = 1 + 9 + 36 + 64 = 110 pooled positions
S_PAD = 128                       # pad pooled axis to one full lane width


def psp_pool_matrix(H, W, sizes=PSP_SIZES):
  """(S, H*W) matrix reproducing PSPModule: adaptive avg pools (PyTorch
  floor/ceil bin rule), flattened row-major per size, concatenated."""
  rows = []
  for s in sizes:
    for i in range(s):
      r0 = (i * H) // s
      r1 = -(-((i + 1) * H) // s)          # ceil
      for j in range(s):
        c0 = (j * W) // s
        c1 = -(-((j + 1) * W) // s)        # ceil
        m = np.zeros((H, W), dtype=np.float32)
        m[r0:r1, c0:c1] = 1.0 / float((r1 - r0) * (c1 - c0))
        rows.append(m.reshape(-1))
  return np.stack(rows, axis=0)


def _choose_query_tile(hw, max_tile=2048):
  """Largest multiple of 128 dividing hw and <= max_tile (else hw itself)."""
  if hw <= max_tile:
    return hw
  best = None
  t = 128
  while t <= max_tile:
    if hw % t == 0:
      best = t
    t += 128
  return best if best is not None else hw


def _kv_kernel(x_ref, pmatT_ref, wkv_ref, bkv_ref, kv_ref):
  """Per-image PSP pooling + fused key|value projection.

  x: (C, HW) bf16; pmatT: (HW, S_PAD) bf16; wkv: (Kc+Vc, C) bf16; bkv: (Kc+Vc,1) f32.
  Output kv: (Kc+Vc, S_PAD) bf16.
  """
  # TODO(synk): for extreme HW the pool reduction itself could be tiled over an
  # "arbitrary" HW grid axis with an accumulator; not needed at typical sizes.
  x = x_ref[0]                                                      # (C, HW) bf16
  pooled = jnp.dot(x, pmatT_ref[...], preferred_element_type=jnp.float32)
  kv = jnp.dot(wkv_ref[...], pooled.astype(jnp.bfloat16),
               preferred_element_type=jnp.float32) + bkv_ref[...]
  kv_ref[0] = kv.astype(kv_ref.dtype)                               # (Kc+Vc, S_PAD)


def _attn_kernel(x_ref, kv_ref, smask_ref,
                 wq_ref, bq_ref, wfc_ref, wfx_ref, bf_ref,
                 o_ref, *, key_channels):
  """Query tile -> similarity -> softmax -> context -> folded output conv."""
  x = x_ref[0]                                         # (C, TQ) bf16
  kv = kv_ref[0]                                       # (Kc+Vc, S_PAD) bf16
  key = kv[:key_channels]                              # (Kc, S_PAD) static slice
  val = kv[key_channels:]                              # (Vc, S_PAD)

  # Query projection; 1/sqrt(Kc) already folded into wq/bq on the host.
  q = jnp.dot(wq_ref[...], x, preferred_element_type=jnp.float32) + bq_ref[...]
  q = q.astype(jnp.bfloat16)                           # (Kc, TQ)

  # S-major similarity (S_PAD, TQ): only the tiny key operand is in "T" form;
  # q stays put and the big tensors never cross the XLU.
  simT = lax.dot_general(key, q, (((0,), (0,)), ((), ())),
                         preferred_element_type=jnp.float32)

  # Additive pad mask (precomputed on host, f32, 0 / -1e30) on the pooled axis.
  simT = simT + smask_ref[...]

  # Softmax over the 128 pooled positions (axis 0), all f32; exact reciprocal.
  m = jnp.max(simT, axis=0, keepdims=True)
  e = jnp.exp(simT - m)
  p = (e / jnp.sum(e, axis=0, keepdims=True)).astype(jnp.bfloat16)  # (S_PAD, TQ)

  # Context: clean (Vc, 128) x (128, TQ) matmul, no transposes.
  ctx = jnp.dot(val, p, preferred_element_type=jnp.float32).astype(jnp.bfloat16)

  # Output conv: attention-output conv `W` already folded into the concat conv.
  # concat([context, x]) is implicit: weight split into ctx half / x half.
  out = (jnp.dot(wfc_ref[...], ctx, preferred_element_type=jnp.float32)
         + jnp.dot(wfx_ref[...], x, preferred_element_type=jnp.float32)
         + bf_ref[...])
  # TODO(synk): Dropout2d is identity in eval mode; training-mode channel dropout not implemented.
  o_ref[0] = out.astype(o_ref.dtype)                   # (OutC, TQ) lane-dense store


def apnb_forward(x_nchw, params, *, max_query_tile=2048):
  N, C, H, W = x_nchw.shape
  HW = H * W
  Kc = params["wk"].shape[1]
  Vc = params["wv"].shape[1]
  KVc = Kc + Vc
  OutC = params["wf_x"].shape[1]
  S = params["pmat"].shape[0]
  scale = float(Kc) ** -0.5

  f32, bf16 = jnp.float32, jnp.bfloat16
  TQ = _choose_query_tile(HW, max_query_tile)
  n_tiles = HW // TQ

  # NCHW -> (N, C, HW); bf16 halves HBM->VMEM traffic for the activations.
  x = x_nchw.reshape(N, C, HW).astype(bf16)

  # ---- host-side folding / packing (exact, eval mode); weights in bf16 ----
  pmat = params["pmat"]
  pmatT = jnp.zeros((HW, S_PAD), f32).at[:, :S].set(pmat.T).astype(bf16)
  wqT = (params["wk"] * scale).T.astype(bf16)                        # (Kc, C)
  bq = (params["bk"] * scale).T.astype(f32)                          # (Kc, 1)
  wkvT = jnp.concatenate([params["wk"], params["wv"]], axis=1).T.astype(bf16)   # (KVc, C)
  bkv = jnp.concatenate([params["bk"], params["bv"]], axis=1).T.astype(f32)     # (KVc, 1)
  wfcT = (params["ww"] @ params["wf_ctx"]).T.astype(bf16)            # (OutC, Vc)
  wfxT = params["wf_x"].T.astype(bf16)                               # (OutC, C)
  bf = (params["bw"] @ params["wf_ctx"] + params["bf"]).T.astype(f32)  # (OutC, 1)
  # Softmax pad mask on the pooled axis, precomputed once (kept in f32).
  smask = jnp.where(jnp.arange(S_PAD) < S, 0.0, -1e30).astype(f32).reshape(S_PAD, 1)

  # ---- VMEM budget (per-step working set with headroom, capped for v7x) ----
  bytes_attn = (
      2 * C * TQ * 2                      # x tile bf16, double-buffered
      + 2 * OutC * TQ * 4                 # out tile f32, double-buffered
      + 2 * KVc * S_PAD * 2               # kv block bf16, double-buffered
      + (Kc * C + OutC * Vc + OutC * C) * 2
      + (Kc + OutC + S_PAD) * 4
      + (Kc + 3 * S_PAD + Vc + 2 * OutC) * TQ * 4)   # live f32 intermediates
  bytes_kv = (
      2 * C * HW * 2 + 2 * KVc * S_PAD * 2
      + HW * S_PAD * 2 + KVc * C * 2 + KVc * 4
      + (C + KVc) * S_PAD * 4)
  vmem_limit = int(min(max(3 * max(bytes_attn, bytes_kv), 32 * 2 ** 20), 48 * 2 ** 20))

  kv_cost = pl.CostEstimate(
      flops=int(2 * N * S_PAD * (C * HW + KVc * C)),
      transcendentals=0,
      bytes_accessed=int(N * C * HW * 2 + HW * S_PAD * 2 + KVc * C * 2
                         + KVc * 4 + N * KVc * S_PAD * 2))
  attn_cost = pl.CostEstimate(
      flops=int(2 * N * HW * (Kc * C + Kc * S_PAD + Vc * S_PAD + OutC * (Vc + C))),
      transcendentals=int(N * HW * S_PAD),
      bytes_accessed=int(N * C * HW * 2 + N * KVc * S_PAD * 2 + N * OutC * HW * 4
                         + (Kc * C + OutC * Vc + OutC * C) * 2
                         + (Kc + OutC + S_PAD) * 4))

  def _const_spec(arr, n_grid_axes, single_buffer):
    """Grid-invariant operand; single-buffer it when the API supports it."""
    imap = (lambda n: (0, 0)) if n_grid_axes == 1 else (lambda n, t: (0, 0))
    if single_buffer:
      return pl.BlockSpec(arr.shape, imap, pipeline_mode=pl.Buffered(1))
    return pl.BlockSpec(arr.shape, imap)

  def _run(single_buffer_weights):
    kv = pl.pallas_call(
        _kv_kernel,
        out_shape=jax.ShapeDtypeStruct((N, KVc, S_PAD), bf16),
        grid=(N,),
        in_specs=[
            pl.BlockSpec((1, C, HW), lambda n: (n, 0, 0)),
            _const_spec(pmatT, 1, single_buffer_weights),
            _const_spec(wkvT, 1, single_buffer_weights),
            _const_spec(bkv, 1, single_buffer_weights),
        ],
        out_specs=pl.BlockSpec((1, KVc, S_PAD), lambda n: (n, 0, 0)),
        compiler_params=pltpu.CompilerParams(
            dimension_semantics=("parallel",),
            vmem_limit_bytes=vmem_limit),
        cost_estimate=kv_cost,
    )(x, pmatT, wkvT, bkv)

    out = pl.pallas_call(
        functools.partial(_attn_kernel, key_channels=Kc),
        out_shape=jax.ShapeDtypeStruct((N, OutC, HW), f32),
        grid=(N, n_tiles),
        in_specs=[
            pl.BlockSpec((1, C, TQ), lambda n, t: (n, 0, t)),
            pl.BlockSpec((1, KVc, S_PAD), lambda n, t: (n, 0, 0)),
            _const_spec(smask, 2, single_buffer_weights),
            _const_spec(wqT, 2, single_buffer_weights),
            _const_spec(bq, 2, single_buffer_weights),
            _const_spec(wfcT, 2, single_buffer_weights),
            _const_spec(wfxT, 2, single_buffer_weights),
            _const_spec(bf, 2, single_buffer_weights),
        ],
        out_specs=pl.BlockSpec((1, OutC, TQ), lambda n, t: (n, 0, t)),
        compiler_params=pltpu.CompilerParams(
            dimension_semantics=("parallel", "parallel"),
            vmem_limit_bytes=vmem_limit),
        cost_estimate=attn_cost,
    )(x, kv, smask, wqT, bq, wfcT, wfxT, bf)
    return out

  try:
    out = _run(single_buffer_weights=hasattr(pl, "Buffered"))
  except Exception:
    # Fallback for Pallas builds that reject pipeline_mode=pl.Buffered(1).
    out = _run(single_buffer_weights=False)

  return out.reshape(N, OutC, H, W)


def apnb_reference(x_nchw, params):
  """Pure-JAX f32 reference mirroring the PyTorch forward (no folding)."""
  N, C, H, W = x_nchw.shape
  x = jnp.transpose(x_nchw.reshape(N, C, H * W), (0, 2, 1))        # (N, HW, C)
  P = params["pmat"]
  Kc = params["wk"].shape[1]
  q = x @ params["wk"] + params["bk"]
  v = x @ params["wv"] + params["bv"]
  key = jnp.einsum("sp,npk->nsk", P, q)
  val = jnp.einsum("sp,npv->nsv", P, v)
  sim = jnp.einsum("nqk,nsk->nqs", q, key) * (float(Kc) ** -0.5)
  sm = jax.nn.softmax(sim, axis=-1)
  ctx = jnp.einsum("nqs,nsv->nqv", sm, val)
  ctx = ctx @ params["ww"] + params["bw"]
  out = ctx @ params["wf_ctx"] + x @ params["wf_x"] + params["bf"]
  return jnp.transpose(out, (0, 2, 1)).reshape(N, -1, H, W)


def init_params(key, in_channels, out_channels, key_channels, value_channels, H, W):
  # NOTE: the PyTorch module zero-inits the attention output conv `W`; here all
  # weights are random (deterministic) so the full data path is exercised.
  ks = jax.random.split(key, 8)
  C, OutC, Kc, Vc = in_channels, out_channels, key_channels, value_channels
  assert OutC == C, "APNB requires out_channels == in_channels for the final concat conv."
  p = {
      "pmat": jnp.asarray(psp_pool_matrix(H, W), jnp.float32),
      # f_key / f_query shared 1x1 conv: torch weight (Kc, C) -> stored transposed (C, Kc)
      "wk": jax.random.normal(ks[0], (C, Kc), jnp.float32) * 0.1,
      "bk": jax.random.normal(ks[1], (1, Kc), jnp.float32) * 0.1,
      # f_value 1x1 conv
      "wv": jax.random.normal(ks[2], (C, Vc), jnp.float32) * 0.1,
      "bv": jax.random.normal(ks[3], (1, Vc), jnp.float32) * 0.1,
      # W: value_channels -> out_channels 1x1 conv
      "ww": jax.random.normal(ks[4], (Vc, OutC), jnp.float32) * 0.1,
      "bw": jax.random.normal(ks[5], (1, OutC), jnp.float32) * 0.1,
      # conv_bn_dropout conv: (OutC, 2C) split into context half / feats half
      "wf_ctx": jax.random.normal(ks[6], (OutC, OutC), jnp.float32) * 0.1,
      "wf_x": jax.random.normal(ks[7], (C, OutC), jnp.float32) * 0.1,
      "bf": jnp.zeros((1, OutC), jnp.float32),
  }
  return p


if __name__ == "__main__":
  N, C, H, W = 2, 32, 16, 16          # in_channels = out_channels = 32
  Kc, Vc = 16, 16                      # key_channels, value_channels

  root = jax.random.PRNGKey(0)
  kx, kp = jax.random.split(root)
  x = jax.random.normal(kx, (N, C, H, W), jnp.float32)
  params = init_params(kp, C, C, Kc, Vc, H, W)

  out = jax.block_until_ready(apnb_forward(x, params))
  ref = jax.block_until_ready(apnb_reference(x, params))
  assert out.shape == (N, C, H, W)
  # Tolerance reflects bf16 MXU operands (f32 accumulation, f32 softmax); the
  # f32 reference path rounds nothing, so ~1e-2 absolute deviations are expected.
  np.testing.assert_allclose(np.asarray(out), np.asarray(ref), rtol=3e-2, atol=3e-2)

  print("KERNEL_OK")
</pallas_src>

<mosaic_0001>
module attributes {stable_mosaic.version = 11 : i64} {
  func.func @_kv_kernel(%arg0: i32, %arg1: memref<1x32x256xbf16, #tpu.memory_space<vmem>>, %arg2: memref<256x128xbf16, #tpu.memory_space<vmem>>, %arg3: memref<32x32xbf16, #tpu.memory_space<vmem>>, %arg4: memref<32x1xf32, #tpu.memory_space<vmem>>, %arg5: memref<1x32x128xbf16, #tpu.memory_space<vmem>>) attributes {dimension_semantics = [#tpu.dimension_semantics<parallel>], iteration_bounds = array<i64: 2>, scalar_prefetch = 0 : i64, scratch_operands = 0 : i64, tpu.core_type = #tpu.core_type<tc>, window_params = [{transform_indices = @transform_0, window_bounds = array<i64: 1, 32, 256>}, {pipeline_mode = #tpu.pipeline_mode<synchronous>, transform_indices = @transform_1, window_bounds = array<i64: 256, 128>}, {pipeline_mode = #tpu.pipeline_mode<synchronous>, transform_indices = @transform_2, window_bounds = array<i64: 32, 32>}, {pipeline_mode = #tpu.pipeline_mode<synchronous>, transform_indices = @transform_3, window_bounds = array<i64: 32, 1>}, {transform_indices = @transform_4, window_bounds = array<i64: 1, 32, 128>}]} {
    %c0 = arith.constant 0 : index
    %c0_0 = arith.constant 0 : index
    %c0_1 = arith.constant 0 : index
    %0 = vector.load %arg1[%c0, %c0_0, %c0_1] : memref<1x32x256xbf16, #tpu.memory_space<vmem>>, vector<1x32x256xbf16>
    %1 = vector.shape_cast %0 : vector<1x32x256xbf16> to vector<32x256xbf16>
    %c0_2 = arith.constant 0 : index
    %c0_3 = arith.constant 0 : index
    %2 = vector.load %arg2[%c0_2, %c0_3] : memref<256x128xbf16, #tpu.memory_space<vmem>>, vector<256x128xbf16>
    %cst = arith.constant dense<0.000000e+00> : vector<32x128xf32>
    %3 = tpu.matmul %1, %2, %cst {dimension_numbers = #tpu.dot_dimension_numbers<[1], [0], [0], [1], [0, 0, 1, 1], [], []>} : vector<32x256xbf16>, vector<256x128xbf16>, vector<32x128xf32> -> vector<32x128xf32>
    %c0_4 = arith.constant 0 : index
    %c0_5 = arith.constant 0 : index
    %4 = vector.load %arg3[%c0_4, %c0_5] : memref<32x32xbf16, #tpu.memory_space<vmem>>, vector<32x32xbf16>
    %5 = arith.truncf %3 : vector<32x128xf32> to vector<32x128xbf16>
    %cst_6 = arith.constant dense<0.000000e+00> : vector<32x128xf32>
    %6 = tpu.matmul %4, %5, %cst_6 {dimension_numbers = #tpu.dot_dimension_numbers<[1], [0], [0], [1], [0, 0, 1, 1], [], []>} : vector<32x32xbf16>, vector<32x128xbf16>, vector<32x128xf32> -> vector<32x128xf32>
    %c0_7 = arith.constant 0 : index
    %c0_8 = arith.constant 0 : index
    %7 = vector.load %arg4[%c0_7, %c0_8] : memref<32x1xf32, #tpu.memory_space<vmem>>, vector<32x1xf32>
    %8 = vector.broadcast %7 : vector<32x1xf32> to vector<32x128xf32>
    %9 = arith.addf %6, %8 : vector<32x128xf32>
    %10 = arith.truncf %9 : vector<32x128xf32> to vector<32x128xbf16>
    %c0_9 = arith.constant 0 : index
    %c0_10 = arith.constant 0 : index
    %c0_11 = arith.constant 0 : index
    %11 = vector.load %arg5[%c0_9, %c0_10, %c0_11] : memref<1x32x128xbf16, #tpu.memory_space<vmem>>, vector<1x32x128xbf16>
    %12 = vector.shape_cast %11 : vector<1x32x128xbf16> to vector<32x128xbf16>
    %13 = vector.shape_cast %10 : vector<32x128xbf16> to vector<1x32x128xbf16>
    tpu.vector_store %arg5[%c0_9, %c0_10, %c0_11], %13 {strides = array<i32>} : memref<1x32x128xbf16, #tpu.memory_space<vmem>>, vector<1x32x128xbf16>,
    return
  }
  func.func @transform_0(%arg0: i32) -> (i32, i32, i32) {
    %c0_i32 = arith.constant 0 : i32
    %c0_i32_0 = arith.constant 0 : i32
    %c0_i32_1 = arith.constant 0 : i32
    return %arg0, %c0_i32, %c0_i32_0 : i32, i32, i32
  }
  func.func @transform_1(%arg0: i32) -> (i32, i32) {
    %c0_i32 = arith.constant 0 : i32
    %c0_i32_0 = arith.constant 0 : i32
    %c0_i32_1 = arith.constant 0 : i32
    return %c0_i32, %c0_i32_0 : i32, i32
  }
  func.func @transform_2(%arg0: i32) -> (i32, i32) {
    %c0_i32 = arith.constant 0 : i32
    %c0_i32_0 = arith.constant 0 : i32
    %c0_i32_1 = arith.constant 0 : i32
    return %c0_i32, %c0_i32_0 : i32, i32
  }
  func.func @transform_3(%arg0: i32) -> (i32, i32) {
    %c0_i32 = arith.constant 0 : i32
    %c0_i32_0 = arith.constant 0 : i32
    %c0_i32_1 = arith.constant 0 : i32
    return %c0_i32, %c0_i32_0 : i32, i32
  }
  func.func @transform_4(%arg0: i32) -> (i32, i32, i32) {
    %c0_i32 = arith.constant 0 : i32
    %c0_i32_0 = arith.constant 0 : i32
    %c0_i32_1 = arith.constant 0 : i32
    return %arg0, %c0_i32, %c0_i32_0 : i32, i32, i32
  }
}

module attributes {stable_mosaic.version = 11 : i64} {
  func.func @_kv_kernel(%arg0: i32, %arg1: memref<1x32x256xbf16, #tpu.memory_space<vmem>>, %arg2: memref<256x128xbf16, #tpu.memory_space<vmem>>, %arg3: memref<32x32xbf16, #tpu.memory_space<vmem>>, %arg4: memref<32x1xf32, #tpu.memory_space<vmem>>, %arg5: memref<1x32x128xbf16, #tpu.memory_space<vmem>>) attributes {dimension_semantics = [#tpu.dimension_semantics<parallel>], iteration_bounds = array<i64: 2>, scalar_prefetch = 0 : i64, scratch_operands = 0 : i64, tpu.core_type = #tpu.core_type<tc>, window_params = [{transform_indices = @transform_0, window_bounds = array<i64: 1, 32, 256>}, {pipeline_mode = #tpu.pipeline_mode<synchronous>, transform_indices = @transform_1, window_bounds = array<i64: 256, 128>}, {pipeline_mode = #tpu.pipeline_mode<synchronous>, transform_indices = @transform_2, window_bounds = array<i64: 32, 32>}, {pipeline_mode = #tpu.pipeline_mode<synchronous>, transform_indices = @transform_3, window_bounds = array<i64: 32, 1>}, {transform_indices = @transform_4, window_bounds = array<i64: 1, 32, 128>}]} {
    %c0 = arith.constant 0 : index
    %c0_0 = arith.constant 0 : index
    %c0_1 = arith.constant 0 : index
    %0 = vector.load %arg1[%c0, %c0_0, %c0_1] : memref<1x32x256xbf16, #tpu.memory_space<vmem>>, vector<1x32x256xbf16>
    %1 = vector.shape_cast %0 : vector<1x32x256xbf16> to vector<32x256xbf16>
    %c0_2 = arith.constant 0 : index
    %c0_3 = arith.constant 0 : index
    %2 = vector.load %arg2[%c0_2, %c0_3] : memref<256x128xbf16, #tpu.memory_space<vmem>>, vector<256x128xbf16>
    %cst = arith.constant dense<0.000000e+00> : vector<32x128xf32>
    %3 = tpu.matmul %1, %2, %cst {dimension_numbers = #tpu.dot_dimension_numbers<[1], [0], [0], [1], [0, 0, 1, 1], [], []>} : vector<32x256xbf16>, vector<256x128xbf16>, vector<32x128xf32> -> vector<32x128xf32>
    %c0_4 = arith.constant 0 : index
    %c0_5 = arith.constant 0 : index
    %4 = vector.load %arg3[%c0_4, %c0_5] : memref<32x32xbf16, #tpu.memory_space<vmem>>, vector<32x32xbf16>
    %5 = arith.truncf %3 : vector<32x128xf32> to vector<32x128xbf16>
    %cst_6 = arith.constant dense<0.000000e+00> : vector<32x128xf32>
    %6 = tpu.matmul %4, %5, %cst_6 {dimension_numbers = #tpu.dot_dimension_numbers<[1], [0], [0], [1], [0, 0, 1, 1], [], []>} : vector<32x32xbf16>, vector<32x128xbf16>, vector<32x128xf32> -> vector<32x128xf32>
    %c0_7 = arith.constant 0 : index
    %c0_8 = arith.constant 0 : index
    %7 = vector.load %arg4[%c0_7, %c0_8] : memref<32x1xf32, #tpu.memory_space<vmem>>, vector<32x1xf32>
    %8 = vector.broadcast %7 : vector<32x1xf32> to vector<32x128xf32>
    %9 = arith.addf %6, %8 : vector<32x128xf32>
    %10 = arith.truncf %9 : vector<32x128xf32> to vector<32x128xbf16>
    %c0_9 = arith.constant 0 : index
    %c0_10 = arith.constant 0 : index
    %c0_11 = arith.constant 0 : index
    %11 = vector.load %arg5[%c0_9, %c0_10, %c0_11] : memref<1x32x128xbf16, #tpu.memory_space<vmem>>, vector<1x32x128xbf16>
    %12 = vector.shape_cast %11 : vector<1x32x128xbf16> to vector<32x128xbf16>
    %13 = vector.shape_cast %10 : vector<32x128xbf16> to vector<1x32x128xbf16>
    tpu.vector_store %arg5[%c0_9, %c0_10, %c0_11], %13 {strides = array<i32>} : memref<1x32x128xbf16, #tpu.memory_space<vmem>>, vector<1x32x128xbf16>,
    return
  }
  func.func @transform_0(%arg0: i32) -> (i32, i32, i32) {
    %c0_i32 = arith.constant 0 : i32
    %c0_i32_0 = arith.constant 0 : i32
    %c0_i32_1 = arith.constant 0 : i32
    return %arg0, %c0_i32, %c0_i32_0 : i32, i32, i32
  }
  func.func @transform_1(%arg0: i32) -> (i32, i32) {
    %c0_i32 = arith.constant 0 : i32
    %c0_i32_0 = arith.constant 0 : i32
    %c0_i32_1 = arith.constant 0 : i32
    return %c0_i32, %c0_i32_0 : i32, i32
  }
  func.func @transform_2(%arg0: i32) -> (i32, i32) {
    %c0_i32 = arith.constant 0 : i32
    %c0_i32_0 = arith.constant 0 : i32
    %c0_i32_1 = arith.constant 0 : i32
    return %c0_i32, %c0_i32_0 : i32, i32
  }
  func.func @transform_3(%arg0: i32) -> (i32, i32) {
    %c0_i32 = arith.constant 0 : i32
    %c0_i32_0 = arith.constant 0 : i32
    %c0_i32_1 = arith.constant 0 : i32
    return %c0_i32, %c0_i32_0 : i32, i32
  }
  func.func @transform_4(%arg0: i32) -> (i32, i32, i32) {
    %c0_i32 = arith.constant 0 : i32
    %c0_i32_0 = arith.constant 0 : i32
    %c0_i32_1 = arith.constant 0 : i32
    return %arg0, %c0_i32, %c0_i32_0 : i32, i32, i32
  }
}

</mosaic_0001>

<llo_original>
// kernel: tpu_custom_call.1
$region0: #{tpu_custom_call.1}
  #allocation0 [shape = 'u32[]', space=smem, size = 0x4, offset = 0x4, fixed_abs, tag = 'smem constant byte address 0x4 - core index']
  #allocation1 [shape = 'u32[72,128]{1,0:T(1,128)}', space=vmem, size = 0x9000, scoped, tag = 'internal scratch']
  %s0 = inlined_call_operand.hbm [shape: bf16[2,32,256], index: 0, kind: input, shape index: {}]
  %s1 = inlined_call_operand.hbm [shape: bf16[256,128], index: 1, kind: input, shape index: {}]
  %s2 = inlined_call_operand.vmem [shape: bf16[32,32], index: 2, kind: input, shape index: {}]
  %s3 = inlined_call_operand.vmem [shape: f32[32,1], index: 3, kind: input, shape index: {}]
  %s4 = inlined_call_operand.hbm [shape: bf16[2,32,128], index: 4, kind: output, shape index: {}]
  %s5 = sld [smem:[#allocation0]]
  $region57: #{tpu_custom_call.1} parent=0
    _
  %s7 = ssub.s32 1, %s5
  %s8 = scalar_select 0, %s7, %s5
  $region1: #{tpu_custom_call.1} parent=0
    #allocation2 [shape = 'u8[32768]{0}', space=vmem, size = 0x8000, scoped, tag = 'input window, operand 0']
    #allocation3 [shape = 's32[2]{0}', space=sflag, size = 0x8, scoped, tag = 'scoped memory for tpu_custom_call.1']
    #allocation4 [shape = 's32[2]{0}', space=sflag, size = 0x8, scoped, tag = 'scoped memory for tpu_custom_call.1']
    #allocation5 [shape = 'u8[65536]{0}', space=vmem, size = 0x10000, scoped, tag = 'input window, operand 1, single buffered']
    #allocation6 [shape = 's32[1]{0}', space=sflag, size = 0x4, scoped, tag = 'scoped memory for tpu_custom_call.1']
    #allocation7 [shape = 'u8[16384]{0}', space=vmem, size = 0x4000, scoped, tag = 'output window, operand 0']
    %9 = vsyncpa [#allocation3], 0
    %s10 = scalar_lea.sflag [#allocation3], 1
    %11 = vsyncpa %s10, 0
    %12 = vsyncpa [#allocation6], 0
    %13 = vsyncpa [#allocation4], 0
    %s14 = scalar_lea.sflag [#allocation4], 1
    %15 = vsyncpa %s14, 0
    loop: start=0, step=1, limit=4
    $region2: #{tpu_custom_call.1} parent=1 // loop_pre_header
      _
    $region3: #{tpu_custom_call.1} parent=1 // loop_header
      %s17 = sphi 0, %s21
      %p18 = scmp.ge.s32.totalorder %s17, 4
      %s27 = sphi 0, %s29
      %s30 = sphi 0, %s27
      %s31 = sphi 0, %s30
      %s47 = sphi 0, %s31
      %s51 = sphi 0, %s51
      %s53 = sphi 0, %s51
      %s54 = sphi 0, %s53
      %s68 = sphi 0, %s54
      %s72 = sphi 0, %s72
      %s74 = sphi 0, %s72
      %s75 = sphi 0, %s74
      %s89 = sphi 0, %s75
      %s93 = sphi 0, %s93
      %s95 = sphi 0, %s93
      %s96 = sphi 0, %s95
      %s110 = sphi 0, %s96
      %s116 = sphi 0, %s118
      %s119 = sphi 0, %s116
      %s120 = sphi 0, %s119
      %s136 = sphi 0, %s120
    $region4: #{tpu_custom_call.1} parent=1 // loop_header_branch
      %20 = sbr.rel (%p18) target = $region8
    $region5: #{tpu_custom_call.1} parent=1 // loop_body
      %s22 = ssub.s32 %s17, 1
      %s23 = ssub.s32 %s17, 2
      %s24 = sadd.s32 %s17, 1
      %s25 = ssub.s32 %s17, %s24
      %p26 = scmp.eq.s32.totalorder %s25, 0
      %s28 = sadd.s32 %s27, 1
      %s29 = scalar_select %p26, %s27, %s28
      %p32 = pneg %p26
      %p33 = scmp.eq.s32.totalorder %s17, 1
      %p34 = por %p32, %p33
      %p35 = scmp.ne.s32.totalorder %s27, %s30
      %p36 = scmp.eq.s32.totalorder %s17, 0
      %p37 = por %p35, %p36
      %p38 = scmp.ne.s32.totalorder %s27, %s30
      %p39 = scmp.eq.s32.totalorder %s22, 1
      %p40 = por %p38, %p39
      %p41 = scmp.ne.s32.totalorder %s30, %s31
      %p42 = scmp.eq.s32.totalorder %s22, 0
      %p43 = por %p41, %p42
      %p44 = scmp.ne.s32.totalorder %s30, %s31
      %p45 = scmp.eq.s32.totalorder %s23, 1
      %p46 = por %p44, %p45
      %p48 = scmp.ne.s32.totalorder %s31, %s47
      %p49 = scmp.eq.s32.totalorder %s23, 0
      %p50 = por %p48, %p49
      %s52 = sadd.s32 %s51, 1
      %p55 = scmp.eq.s32.totalorder %s17, 1
      %p56 = scmp.ne.s32.totalorder %s51, %s53
      %p57 = scmp.eq.s32.totalorder %s17, 0
      %p58 = por %p56, %p57
      %p59 = scmp.ne.s32.totalorder %s51, %s53
      %p60 = scmp.eq.s32.totalorder %s22, 1
      %p61 = por %p59, %p60
      %p62 = scmp.ne.s32.totalorder %s53, %s54
      %p63 = scmp.eq.s32.totalorder %s22, 0
      %p64 = por %p62, %p63
      %p65 = scmp.ne.s32.totalorder %s53, %s54
      %p66 = scmp.eq.s32.totalorder %s23, 1
      %p67 = por %p65, %p66
      %p69 = scmp.ne.s32.totalorder %s54, %s68
      %p70 = scmp.eq.s32.totalorder %s23, 0
      %p71 = por %p69, %p70
      %s73 = sadd.s32 %s72, 1
      %p76 = scmp.eq.s32.totalorder %s17, 1
      %p77 = scmp.ne.s32.totalorder %s72, %s74
      %p78 = scmp.eq.s32.totalorder %s17, 0
      %p79 = por %p77, %p78
      %p80 = scmp.ne.s32.totalorder %s72, %s74
      %p81 = scmp.eq.s32.totalorder %s22, 1
      %p82 = por %p80, %p81
      %p83 = scmp.ne.s32.totalorder %s74, %s75
      %p84 = scmp.eq.s32.totalorder %s22, 0
      %p85 = por %p83, %p84
      %p86 = scmp.ne.s32.totalorder %s74, %s75
      %p87 = scmp.eq.s32.totalorder %s23, 1
      %p88 = por %p86, %p87
      %p90 = scmp.ne.s32.totalorder %s75, %s89
      %p91 = scmp.eq.s32.totalorder %s23, 0
      %p92 = por %p90, %p91
      %s94 = sadd.s32 %s93, 1
      %p97 = scmp.eq.s32.totalorder %s17, 1
      %p98 = scmp.ne.s32.totalorder %s93, %s95
      %p99 = scmp.eq.s32.totalorder %s17, 0
      %p100 = por %p98, %p99
      %p101 = scmp.ne.s32.totalorder %s93, %s95
      %p102 = scmp.eq.s32.totalorder %s22, 1
      %p103 = por %p101, %p102
      %p104 = scmp.ne.s32.totalorder %s95, %s96
      %p105 = scmp.eq.s32.totalorder %s22, 0
      %p106 = por %p104, %p105
      %p107 = scmp.ne.s32.totalorder %s95, %s96
      %p108 = scmp.eq.s32.totalorder %s23, 1
      %p109 = por %p107, %p108
      %p111 = scmp.ne.s32.totalorder %s96, %s110
      %p112 = scmp.eq.s32.totalorder %s23, 0
      %p113 = por %p111, %p112
      %s114 = ssub.s32 %s17, %s24
      %p115 = scmp.eq.s32.totalorder %s114, 0
      %s117 = sadd.s32 %s116, 1
      %s118 = scalar_select %p115, %s116, %s117
      %p121 = pneg %p115
      %p122 = scmp.eq.s32.totalorder %s17, 1
      %p123 = por %p121, %p122
      %p124 = scmp.ne.s32.totalorder %s116, %s119
      %p125 = scmp.eq.s32.totalorder %s17, 0
      %p126 = por %p124, %p125
      %p127 = scmp.ne.s32.totalorder %s116, %s119
      %p128 = scmp.eq.s32.totalorder %s22, 1
      %p129 = por %p127, %p128
      %p130 = scmp.ne.s32.totalorder %s119, %s120
      %p131 = scmp.eq.s32.totalorder %s22, 0
      %p132 = por %p130, %p131
      %p133 = scmp.ne.s32.totalorder %s119, %s120
      %p134 = scmp.eq.s32.totalorder %s23, 1
      %p135 = por %p133, %p134
      %p137 = scmp.ne.s32.totalorder %s120, %s136
      %p138 = scmp.eq.s32.totalorder %s23, 0
      %p139 = por %p137, %p138
      %p140 = scmp.le.s32.totalorder 1, %s17
      %p141 = scmp.lt.s32.totalorder %s17, 3
      %p142 = pnand %p140, %p141
      %p143 = pneg %p142
      // Predicated region
      $region9: #{tpu_custom_call.1} parent=5 // pred_check
        _
      $region10: #{tpu_custom_call.1} parent=5 // pred_check_branch
        %145 = sbr.rel (%p142) target = $region12
      $region11: #{tpu_custom_call.1} parent=5 // pred_region
        %s146 = ssub.s32 %s17, 1
        // Predicated region
        $region13: #{tpu_custom_call.1} parent=11 // pred_check
          %p147 = pneg %p64
        $region14: #{tpu_custom_call.1} parent=11 // pred_check_branch
          %149 = sbr.rel (%p147) target = $region16
        $region15: #{tpu_custom_call.1} parent=11 // pred_region
          %151 = vsyncadd [#allocation6], 0
          %s152 = sshll.u32 %s1, 4
          %s153 = int_to_ptr.hbm [resolvable:$true] %s152
          %s154 = sshll.u32 [#allocation5], 4
          %s155 = int_to_ptr.vmem [resolvable:$true] %s154
          %160 = dma.hbm_to_vmem [thread:$0]  %s153, 2048, %s155, [#allocation6], 64, 64, 4
        $region16: #{tpu_custom_call.1} parent=11 // pred_fallthru
          _
        // Predicated region
        $region17: #{tpu_custom_call.1} parent=11 // pred_check
          %p161 = pneg %p85
        $region18: #{tpu_custom_call.1} parent=11 // pred_check_branch
          %163 = sbr.rel (%p161) target = $region20
        $region19: #{tpu_custom_call.1} parent=11 // pred_region
          _
        $region20: #{tpu_custom_call.1} parent=11 // pred_fallthru
          _
        // Predicated region
        $region21: #{tpu_custom_call.1} parent=11 // pred_check
          %p164 = pneg %p106
        $region22: #{tpu_custom_call.1} parent=11 // pred_check_branch
          %166 = sbr.rel (%p164) target = $region24
        $region23: #{tpu_custom_call.1} parent=11 // pred_region
          _
        $region24: #{tpu_custom_call.1} parent=11 // pred_fallthru
          _
      $region12: #{tpu_custom_call.1} parent=5 // pred_fallthru
        _
      %p167 = scmp.lt.s32.totalorder %s17, 2
      // Predicated region
      $region25: #{tpu_custom_call.1} parent=5 // pred_check
        %p168 = pneg %p167
      $region26: #{tpu_custom_call.1} parent=5 // pred_check_branch
        %170 = sbr.rel (%p168) target = $region28
      $region27: #{tpu_custom_call.1} parent=5 // pred_region
        // Predicated region
        $region29: #{tpu_custom_call.1} parent=27 // pred_check
          %p171 = pneg %p37
        $region30: #{tpu_custom_call.1} parent=27 // pred_check_branch
          %173 = sbr.rel (%p171) target = $region32
        $region31: #{tpu_custom_call.1} parent=27 // pred_region
          %s174 = sand.u32 %s27, 1
          %s175 = scalar_lea.sflag [#allocation3], %s174
          %s176 = sand.u32 %s27, 1
          %s177 = smul.addr %s176, 32
          %s178 = scalar_lea.vmem [#allocation2], %s177
          %180 = vsyncadd %s175, 0
          %s181 = smul.addr %s17, 8
          %s182 = smul.addr %s181, 4
          %s183 = scalar_lea.hbm %s0, %s182
          %s184 = sshll.u32 %s183, 4
          %s185 = int_to_ptr.hbm [resolvable:$true] %s184
          %s186 = sshll.u32 %s178, 4
          %s187 = int_to_ptr.vmem [resolvable:$true] %s186
          %192 = dma.hbm_to_vmem [thread:$0]  %s185, 512, %s187, %s175, 128, 128, 8
        $region32: #{tpu_custom_call.1} parent=27 // pred_fallthru
          _
      $region28: #{tpu_custom_call.1} parent=5 // pred_fallthru
        _
      %p193 = scmp.le.s32.totalorder 1, %s17
      %p194 = scmp.lt.s32.totalorder %s17, 3
      %p195 = pnand %p193, %p194
      %p196 = pneg %p195
      // Predicated region
      $region33: #{tpu_custom_call.1} parent=5 // pred_check
        _
      $region34: #{tpu_custom_call.1} parent=5 // pred_check_branch
        %198 = sbr.rel (%p195) target = $region36
      $region35: #{tpu_custom_call.1} parent=5 // pred_region
        %s199 = ssub.s32 %s17, 1
        %s200 = sand.u32 %s30, 1
        %s201 = scalar_lea.sflag [#allocation3], %s200
        %s202 = sand.u32 %s30, 1
        %s203 = smul.addr %s202, 32
        %s204 = scalar_lea.vmem [#allocation2], %s203
        // Predicated region
        $region37: #{tpu_custom_call.1} parent=35 // pred_check
          %p205 = pneg %p43
        $region38: #{tpu_custom_call.1} parent=35 // pred_check_branch
          %207 = sbr.rel (%p205) target = $region40
        $region39: #{tpu_custom_call.1} parent=35 // pred_region
          %209 = dma.done %s201, 512
        $region40: #{tpu_custom_call.1} parent=35 // pred_fallthru
          _
        // Predicated region
        $region41: #{tpu_custom_call.1} parent=35 // pred_check
          %p210 = pneg %p64
        $region42: #{tpu_custom_call.1} parent=35 // pred_check_branch
          %212 = sbr.rel (%p210) target = $region44
        $region43: #{tpu_custom_call.1} parent=35 // pred_region
          %214 = dma.done [#allocation6], 2048
        $region44: #{tpu_custom_call.1} parent=35 // pred_fallthru
          _
        %s215 = sand.u32 %s30, 1
        %s216 = scalar_lea.sflag [#allocation3], %s215
        %s217 = sand.u32 %s30, 1
        %s218 = smul.addr %s217, 32
        %s219 = scalar_lea.vmem [#allocation2], %s218
        %p220 = pneg %p43
        %p221 = pneg %p40
        %p222 = pneg %p64
        %p223 = pneg %p61
        %p224 = pneg %p85
        %p225 = pneg %p82
        %p226 = pneg %p106
        %p227 = pneg %p103
        %p228 = pneg %p132
        %p229 = pneg %p129
        %s230 = sand.u32 %s119, 1
        %s231 = scalar_lea.sflag [#allocation4], %s230
        %s232 = sand.u32 %s119, 1
        %s233 = smul.addr %s232, 16
        %s234 = scalar_lea.vmem [#allocation7], %s233
        %v236 = vld [vmem:[%s204] sm:$0xff]
        %v237 = vld [vmem:[%s204 + $0x8] sm:$0xff]
        %v238 = vld [vmem:[%s204 + $0x10] sm:$0xff]
        %v239 = vld [vmem:[%s204 + $0x18] sm:$0xff]
        %v240 = vld [vmem:[#allocation5] sm:$0xf]
        %v241 = vld [vmem:[#allocation5 + $0x4] sm:$0xf]
        %v242 = vld [vmem:[#allocation5 + $0x8] sm:$0xf]
        %v243 = vld [vmem:[#allocation5 + $0xc] sm:$0xf]
        %v244 = vld [vmem:[#allocation5 + $0x10] sm:$0xf]
        %v245 = vld [vmem:[#allocation5 + $0x14] sm:$0xf]
        %v246 = vld [vmem:[#allocation5 + $0x18] sm:$0xf]
        %v247 = vld [vmem:[#allocation5 + $0x1c] sm:$0xf]
        %v248 = vld [vmem:[#allocation5 + $0x20] sm:$0xf]
        %v249 = vld [vmem:[#allocation5 + $0x24] sm:$0xf]
        %v250 = vld [vmem:[#allocation5 + $0x28] sm:$0xf]
        %v251 = vld [vmem:[#allocation5 + $0x2c] sm:$0xf]
        %v252 = vld [vmem:[#allocation5 + $0x30] sm:$0xf]
        %v253 = vld [vmem:[#allocation5 + $0x34] sm:$0xf]
        %v254 = vld [vmem:[#allocation5 + $0x38] sm:$0xf]
        %v255 = vld [vmem:[#allocation5 + $0x3c] sm:$0xf]
        %v256 = vld [vmem:[#allocation5 + $0x40] sm:$0xf]
        %v257 = vld [vmem:[#allocation5 + $0x44] sm:$0xf]
        %v258 = vld [vmem:[#allocation5 + $0x48] sm:$0xf]
        %v259 = vld [vmem:[#allocation5 + $0x4c] sm:$0xf]
        %v260 = vld [vmem:[#allocation5 + $0x50] sm:$0xf]
        %v261 = vld [vmem:[#allocation5 + $0x54] sm:$0xf]
        %v262 = vld [vmem:[#allocation5 + $0x58] sm:$0xf]
        %v263 = vld [vmem:[#allocation5 + $0x5c] sm:$0xf]
        %v264 = vld [vmem:[#allocation5 + $0x60] sm:$0xf]
        %v265 = vld [vmem:[#allocation5 + $0x64] sm:$0xf]
        %v266 = vld [vmem:[#allocation5 + $0x68] sm:$0xf]
        %v267 = vld [vmem:[#allocation5 + $0x6c] sm:$0xf]
        %v268 = vld [vmem:[#allocation5 + $0x70] sm:$0xf]
        %v269 = vld [vmem:[#allocation5 + $0x74] sm:$0xf]
        %v270 = vld [vmem:[#allocation5 + $0x78] sm:$0xf]
        %v271 = vld [vmem:[#allocation5 + $0x7c] sm:$0xf]
        %v276 = vunpack.c.l.b16 %v236
        %v277 = vunpack.c.h.b16 %v236
        %v278 = vunpack.c.l.b16 %v237
        %v279 = vunpack.c.h.b16 %v237
        %v280 = vunpack.c.l.b16 %v238
        %v281 = vunpack.c.h.b16 %v238
        %v282 = vunpack.c.l.b16 %v239
        %v283 = vunpack.c.h.b16 %v239
        %v284 = vpack.c.b16 %v278, %v276
        %v285 = vpack.c.b16 %v279, %v277
        %v286 = vpack.c.b16 %v282, %v280
        %v287 = vpack.c.b16 %v283, %v281
        %v324 = vunpack.c.l.b16 %v240
        %v325 = vunpack.c.l.b16 %v241
        %v326 = vunpack.c.l.b16 %v242
        %v327 = vunpack.c.l.b16 %v243
        %v328 = vunpack.c.l.b16 %v244
        %v329 = vunpack.c.l.b16 %v245
        %v330 = vunpack.c.l.b16 %v246
        %v331 = vunpack.c.l.b16 %v247
        %v332 = vunpack.c.l.b16 %v248
        %v333 = vunpack.c.l.b16 %v249
        %v334 = vunpack.c.l.b16 %v250
        %v335 = vunpack.c.l.b16 %v251
        %v336 = vunpack.c.l.b16 %v252
        %v337 = vunpack.c.l.b16 %v253
        %v338 = vunpack.c.l.b16 %v254
        %v339 = vunpack.c.l.b16 %v255
        %v340 = vunpack.c.l.b16 %v256
        %v341 = vunpack.c.l.b16 %v257
        %v342 = vunpack.c.l.b16 %v258
        %v343 = vunpack.c.l.b16 %v259
        %v344 = vunpack.c.l.b16 %v260
        %v345 = vunpack.c.l.b16 %v261
        %v346 = vunpack.c.l.b16 %v262
        %v347 = vunpack.c.l.b16 %v263
        %v348 = vunpack.c.l.b16 %v264
        %v349 = vunpack.c.l.b16 %v265
        %v350 = vunpack.c.l.b16 %v266
        %v351 = vunpack.c.l.b16 %v267
        %v352 = vunpack.c.l.b16 %v268
        %v353 = vunpack.c.l.b16 %v269
        %v354 = vunpack.c.l.b16 %v270
        %v355 = vunpack.c.l.b16 %v271
        %v356 = vpack.c.b16 %v325, %v324
        %v357 = vpack.c.b16 %v327, %v326
        %v358 = vpack.c.b16 %v329, %v328
        %v359 = vpack.c.b16 %v331, %v330
        %v360 = vpack.c.b16 %v333, %v332
        %v361 = vpack.c.b16 %v335, %v334
        %v362 = vpack.c.b16 %v337, %v336
        %v363 = vpack.c.b16 %v339, %v338
        %v364 = vpack.c.b16 %v341, %v340
        %v365 = vpack.c.b16 %v343, %v342
        %v366 = vpack.c.b16 %v345, %v344
        %v367 = vpack.c.b16 %v347, %v346
        %v368 = vpack.c.b16 %v349, %v348
        %v369 = vpack.c.b16 %v351, %v350
        %v370 = vpack.c.b16 %v353, %v352
        %v371 = vpack.c.b16 %v355, %v354
        %388 = vmatpush.bf16.msra.mxu0 %v363
        %389 = vmatpush.bf16.msra.mxu0 %v362
        %390 = vmatpush.bf16.msra.mxu0 %v361
        %391 = vmatpush.bf16.msra.mxu0 %v360
        %392 = vmatpush.bf16.msra.mxu0 %v359
        %393 = vmatpush.bf16.msra.mxu0 %v358
        %394 = vmatpush.bf16.msra.mxu0 %v357
        %395 = vmatpush.bf16.msra.mxu0 %v356
        %396 = vmatmul.bf16.gmra.mxu0 %v284
        %v397 = vpop.f32.mrf.mxu0
        %v398 = vadd.f32 0.0, %v397
        %v399 = vpop.f32.mrf.mxu0
        %v400 = vadd.f32 0.0, %v399
        %401 = vmatmul.bf16.gmra.mxu0 %v286
        %v402 = vpop.f32.mrf.mxu0
        %v403 = vadd.f32 0.0, %v402
        %v404 = vpop.f32.mrf.mxu0
        %v405 = vadd.f32 0.0, %v404
        %406 = vdwg.mxu0
        %407 = vmatpush.bf16.msra.mxu0 %v371
        %408 = vmatpush.bf16.msra.mxu0 %v370
        %409 = vmatpush.bf16.msra.mxu0 %v369
        %410 = vmatpush.bf16.msra.mxu0 %v368
        %411 = vmatpush.bf16.msra.mxu0 %v367
        %412 = vmatpush.bf16.msra.mxu0 %v366
        %413 = vmatpush.bf16.msra.mxu0 %v365
        %414 = vmatpush.bf16.msra.mxu0 %v364
        %415 = vmatmul.bf16.gmra.mxu0 %v285
        %v416 = vpop.f32.mrf.mxu0
        %v417 = vadd.f32 %v398, %v416
        %v418 = vpop.f32.mrf.mxu0
        %v419 = vadd.f32 %v400, %v418
        %420 = vmatmul.bf16.gmra.mxu0 %v287
        %v421 = vpop.f32.mrf.mxu0
        %v422 = vadd.f32 %v403, %v421
        %v423 = vpop.f32.mrf.mxu0
        %v424 = vadd.f32 %v405, %v423
        %425 = vdwg.mxu0
        %v426 = vld [vmem:[%s2] sm:$0xf]
        %v427 = vld [vmem:[%s2 + $0x4] sm:$0xf]
        %v428 = vld [vmem:[%s2 + $0x8] sm:$0xf]
        %v429 = vld [vmem:[%s2 + $0xc] sm:$0xf]
        %v430 = vpack.c.bf16 %v419, %v417
        %v431 = vpack.c.bf16 %v424, %v422
        %v432 = vld [vmem:[%s3] sm:$0xff]
        %v433 = vld [vmem:[%s3 + $0x8] sm:$0xff]
        %v434 = vld [vmem:[%s3 + $0x10] sm:$0xff]
        %v435 = vld [vmem:[%s3 + $0x18] sm:$0xff]
        %437 = vset.pattern.permute.xlu0 0
        %438 = vperm.xlu0 %437, %v432
        %v439 = vpop.permute.xlu0 %438
        %442 = vset.pattern.permute.xlu0 0
        %443 = vperm.xlu0 %442, %v433
        %v444 = vpop.permute.xlu0 %443
        %447 = vset.pattern.permute.xlu0 0
        %448 = vperm.xlu0 %447, %v434
        %v449 = vpop.permute.xlu0 %448
        %452 = vset.pattern.permute.xlu0 0
        %453 = vperm.xlu0 %452, %v435
        %v454 = vpop.permute.xlu0 %453
        %v460 = vunpack.c.l.b16 %v426
        %v461 = vunpack.c.l.b16 %v427
        %v462 = vunpack.c.l.b16 %v428
        %v463 = vunpack.c.l.b16 %v429
        %v464 = vpack.c.b16 %v461, %v460
        %v465 = vpack.c.b16 %v463, %v462
        %vm466 = vcmask 261120
        %v468 = vsel %vm466, %v464, 0
        %v471 = vsel %vm466, %v465, 0
        %473 = vmatpush.bf16.msra.mxu0 0
        %474 = vmatpush.bf16.msra.mxu0 0
        %475 = vmatpush.bf16.msra.mxu0 0
        %476 = vmatpush.bf16.msra.mxu0 0
        %477 = vmatpush.bf16.msra.mxu0 0
        %478 = vmatpush.bf16.msra.mxu0 0
        %479 = vmatpush.bf16.msra.mxu0 %v431
        %480 = vmatpush.bf16.msra.mxu0 %v430
        %481 = vmatmul.bf16.gmra.mxu0 %v468
        %v482 = vpop.f32.mrf.mxu0
        %v483 = vadd.f32 %v439, %v482
        %v484 = vpop.f32.mrf.mxu0
        %v485 = vadd.f32 %v444, %v484
        %486 = vmatmul.bf16.gmra.mxu0 %v471
        %v487 = vpop.f32.mrf.mxu0
        %v488 = vadd.f32 %v449, %v487
        %v489 = vpop.f32.mrf.mxu0
        %v490 = vadd.f32 %v454, %v489
        %491 = vdwg.mxu0
        %v492 = vpack.c.bf16 %v483, %v483
        %v493 = vpack.c.bf16 %v485, %v485
        %v494 = vpack.c.bf16 %v488, %v488
        %v495 = vpack.c.bf16 %v490, %v490
        %496 = vst [vmem:[%s234] sm:$0xf] %v492
        %497 = vst [vmem:[%s234 + $0x4] sm:$0xf] %v493
        %498 = vst [vmem:[%s234 + $0x8] sm:$0xf] %v494
        %499 = vst [vmem:[%s234 + $0xc] sm:$0xf] %v495
        %s500 = sand.u32 %s119, 1
        %s501 = scalar_lea.sflag [#allocation4], %s500
        %s502 = sand.u32 %s119, 1
        %s503 = smul.addr %s502, 16
        %s504 = scalar_lea.vmem [#allocation7], %s503
        // Predicated region
        $region45: #{tpu_custom_call.1} parent=35 // pred_check
          %p505 = pneg %p129
        $region46: #{tpu_custom_call.1} parent=35 // pred_check_branch
          %507 = sbr.rel (%p505) target = $region48
        $region47: #{tpu_custom_call.1} parent=35 // pred_region
          %509 = vsyncadd %s501, 0
          %s510 = smul.addr %s22, 4
          %s511 = smul.addr %s510, 4
          %s512 = scalar_lea.hbm %s4, %s511
          %s513 = sshll.u32 %s504, 4
          %s514 = int_to_ptr.vmem [resolvable:$true] %s513
          %s515 = sshll.u32 %s512, 4
          %s516 = int_to_ptr.hbm [resolvable:$true] %s515
          %521 = dma.vmem_to_hbm [thread:$0]  %s514, 256, %s516, %s501, 64, 64, 4
        $region48: #{tpu_custom_call.1} parent=35 // pred_fallthru
          _
      $region36: #{tpu_custom_call.1} parent=5 // pred_fallthru
        _
      %p522 = scmp.le.s32.totalorder 2, %s17
      // Predicated region
      $region49: #{tpu_custom_call.1} parent=5 // pred_check
        %p523 = pneg %p522
      $region50: #{tpu_custom_call.1} parent=5 // pred_check_branch
        %525 = sbr.rel (%p523) target = $region52
      $region51: #{tpu_custom_call.1} parent=5 // pred_region
        %s526 = ssub.s32 %s17, 2
        // Predicated region
        $region53: #{tpu_custom_call.1} parent=51 // pred_check
          %p527 = pneg %p135
        $region54: #{tpu_custom_call.1} parent=51 // pred_check_branch
          %529 = sbr.rel (%p527) target = $region56
        $region55: #{tpu_custom_call.1} parent=51 // pred_region
          %s530 = sand.u32 %s120, 1
          %s531 = scalar_lea.sflag [#allocation4], %s530
          %s532 = sand.u32 %s120, 1
          %s533 = smul.addr %s532, 16
          %s534 = scalar_lea.vmem [#allocation7], %s533
          %536 = dma.done %s531, 256
        $region56: #{tpu_custom_call.1} parent=51 // pred_fallthru
          _
      $region52: #{tpu_custom_call.1} parent=5 // pred_fallthru
        _
    $region6: #{tpu_custom_call.1} parent=1 // loop_footer
      %s21 = sadd.s32 1, %s17
    $region7: #{tpu_custom_call.1} parent=1 // loop_footer_branch
      %16 = sbr.rel target = $region3
    $region8: #{tpu_custom_call.1} parent=1 // loop_exit
      _
    %537 = vsyncpa [#allocation3], 1
    %s538 = scalar_lea.sflag [#allocation3], 1
    %539 = vsyncpa %s538, 1
    %540 = vsyncpa [#allocation6], 1
    %541 = vsyncpa [#allocation4], 1
    %s542 = scalar_lea.sflag [#allocation4], 1
    %543 = vsyncpa %s542, 1

// kernel: tpu_custom_call.1
$region0: #{tpu_custom_call.1}
  #allocation0 [shape = 'u32[]', space=smem, size = 0x4, offset = 0x4, fixed_abs, tag = 'smem constant byte address 0x4 - core index']
  #allocation1 [shape = 'u32[72,128]{1,0:T(1,128)}', space=vmem, size = 0x9000, scoped, tag = 'internal scratch']
  %s0 = inlined_call_operand.hbm [shape: bf16[2,32,256], index: 0, kind: input, shape index: {}]
  %s1 = inlined_call_operand.hbm [shape: bf16[256,128], index: 1, kind: input, shape index: {}]
  %s2 = inlined_call_operand.vmem [shape: bf16[32,32], index: 2, kind: input, shape index: {}]
  %s3 = inlined_call_operand.vmem [shape: f32[32,1], index: 3, kind: input, shape index: {}]
  %s4 = inlined_call_operand.hbm [shape: bf16[2,32,128], index: 4, kind: output, shape index: {}]
  %s5 = sld [smem:[#allocation0]]
  $region57: #{tpu_custom_call.1} parent=0
    _
  %s7 = ssub.s32 1, %s5
  %s8 = scalar_select 0, %s7, %s5
  $region1: #{tpu_custom_call.1} parent=0
    #allocation2 [shape = 'u8[32768]{0}', space=vmem, size = 0x8000, scoped, tag = 'input window, operand 0']
    #allocation3 [shape = 's32[2]{0}', space=sflag, size = 0x8, scoped, tag = 'scoped memory for tpu_custom_call.1']
    #allocation4 [shape = 's32[2]{0}', space=sflag, size = 0x8, scoped, tag = 'scoped memory for tpu_custom_call.1']
    #allocation5 [shape = 'u8[65536]{0}', space=vmem, size = 0x10000, scoped, tag = 'input window, operand 1, single buffered']
    #allocation6 [shape = 's32[1]{0}', space=sflag, size = 0x4, scoped, tag = 'scoped memory for tpu_custom_call.1']
    #allocation7 [shape = 'u8[16384]{0}', space=vmem, size = 0x4000, scoped, tag = 'output window, operand 0']
    %9 = vsyncpa [#allocation3], 0
    %s10 = scalar_lea.sflag [#allocation3], 1
    %11 = vsyncpa %s10, 0
    %12 = vsyncpa [#allocation6], 0
    %13 = vsyncpa [#allocation4], 0
    %s14 = scalar_lea.sflag [#allocation4], 1
    %15 = vsyncpa %s14, 0
    loop: start=0, step=1, limit=4
    $region2: #{tpu_custom_call.1} parent=1 // loop_pre_header
      _
    $region3: #{tpu_custom_call.1} parent=1 // loop_header
      %s17 = sphi 0, %s21
      %p18 = scmp.ge.s32.totalorder %s17, 4
      %s27 = sphi 0, %s29
      %s30 = sphi 0, %s27
      %s31 = sphi 0, %s30
      %s47 = sphi 0, %s31
      %s51 = sphi 0, %s51
      %s53 = sphi 0, %s51
      %s54 = sphi 0, %s53
      %s68 = sphi 0, %s54
      %s72 = sphi 0, %s72
      %s74 = sphi 0, %s72
      %s75 = sphi 0, %s74
      %s89 = sphi 0, %s75
      %s93 = sphi 0, %s93
      %s95 = sphi 0, %s93
      %s96 = sphi 0, %s95
      %s110 = sphi 0, %s96
      %s116 = sphi 0, %s118
      %s119 = sphi 0, %s116
      %s120 = sphi 0, %s119
      %s136 = sphi 0, %s120
    $region4: #{tpu_custom_call.1} parent=1 // loop_header_branch
      %20 = sbr.rel (%p18) target = $region8
    $region5: #{tpu_custom_call.1} parent=1 // loop_body
      %s22 = ssub.s32 %s17, 1
      %s23 = ssub.s32 %s17, 2
      %s24 = sadd.s32 %s17, 1
      %s25 = ssub.s32 %s17, %s24
      %p26 = scmp.eq.s32.totalorder %s25, 0
      %s28 = sadd.s32 %s27, 1
      %s29 = scalar_select %p26, %s27, %s28
      %p32 = pneg %p26
      %p33 = scmp.eq.s32.totalorder %s17, 1
      %p34 = por %p32, %p33
      %p35 = scmp.ne.s32.totalorder %s27, %s30
      %p36 = scmp.eq.s32.totalorder %s17, 0
      %p37 = por %p35, %p36
      %p38 = scmp.ne.s32.totalorder %s27, %s30
      %p39 = scmp.eq.s32.totalorder %s22, 1
      %p40 = por %p38, %p39
      %p41 = scmp.ne.s32.totalorder %s30, %s31
      %p42 = scmp.eq.s32.totalorder %s22, 0
      %p43 = por %p41, %p42
      %p44 = scmp.ne.s32.totalorder %s30, %s31
      %p45 = scmp.eq.s32.totalorder %s23, 1
      %p46 = por %p44, %p45
      %p48 = scmp.ne.s32.totalorder %s31, %s47
      %p49 = scmp.eq.s32.totalorder %s23, 0
      %p50 = por %p48, %p49
      %s52 = sadd.s32 %s51, 1
      %p55 = scmp.eq.s32.totalorder %s17, 1
      %p56 = scmp.ne.s32.totalorder %s51, %s53
      %p57 = scmp.eq.s32.totalorder %s17, 0
      %p58 = por %p56, %p57
      %p59 = scmp.ne.s32.totalorder %s51, %s53
      %p60 = scmp.eq.s32.totalorder %s22, 1
      %p61 = por %p59, %p60
      %p62 = scmp.ne.s32.totalorder %s53, %s54
      %p63 = scmp.eq.s32.totalorder %s22, 0
      %p64 = por %p62, %p63
      %p65 = scmp.ne.s32.totalorder %s53, %s54
      %p66 = scmp.eq.s32.totalorder %s23, 1
      %p67 = por %p65, %p66
      %p69 = scmp.ne.s32.totalorder %s54, %s68
      %p70 = scmp.eq.s32.totalorder %s23, 0
      %p71 = por %p69, %p70
      %s73 = sadd.s32 %s72, 1
      %p76 = scmp.eq.s32.totalorder %s17, 1
      %p77 = scmp.ne.s32.totalorder %s72, %s74
      %p78 = scmp.eq.s32.totalorder %s17, 0
      %p79 = por %p77, %p78
      %p80 = scmp.ne.s32.totalorder %s72, %s74
      %p81 = scmp.eq.s32.totalorder %s22, 1
      %p82 = por %p80, %p81
      %p83 = scmp.ne.s32.totalorder %s74, %s75
      %p84 = scmp.eq.s32.totalorder %s22, 0
      %p85 = por %p83, %p84
      %p86 = scmp.ne.s32.totalorder %s74, %s75
      %p87 = scmp.eq.s32.totalorder %s23, 1
      %p88 = por %p86, %p87
      %p90 = scmp.ne.s32.totalorder %s75, %s89
      %p91 = scmp.eq.s32.totalorder %s23, 0
      %p92 = por %p90, %p91
      %s94 = sadd.s32 %s93, 1
      %p97 = scmp.eq.s32.totalorder %s17, 1
      %p98 = scmp.ne.s32.totalorder %s93, %s95
      %p99 = scmp.eq.s32.totalorder %s17, 0
      %p100 = por %p98, %p99
      %p101 = scmp.ne.s32.totalorder %s93, %s95
      %p102 = scmp.eq.s32.totalorder %s22, 1
      %p103 = por %p101, %p102
      %p104 = scmp.ne.s32.totalorder %s95, %s96
      %p105 = scmp.eq.s32.totalorder %s22, 0
      %p106 = por %p104, %p105
      %p107 = scmp.ne.s32.totalorder %s95, %s96
      %p108 = scmp.eq.s32.totalorder %s23, 1
      %p109 = por %p107, %p108
      %p111 = scmp.ne.s32.totalorder %s96, %s110
      %p112 = scmp.eq.s32.totalorder %s23, 0
      %p113 = por %p111, %p112
      %s114 = ssub.s32 %s17, %s24
      %p115 = scmp.eq.s32.totalorder %s114, 0
      %s117 = sadd.s32 %s116, 1
      %s118 = scalar_select %p115, %s116, %s117
      %p121 = pneg %p115
      %p122 = scmp.eq.s32.totalorder %s17, 1
      %p123 = por %p121, %p122
      %p124 = scmp.ne.s32.totalorder %s116, %s119
      %p125 = scmp.eq.s32.totalorder %s17, 0
      %p126 = por %p124, %p125
      %p127 = scmp.ne.s32.totalorder %s116, %s119
      %p128 = scmp.eq.s32.totalorder %s22, 1
      %p129 = por %p127, %p128
      %p130 = scmp.ne.s32.totalorder %s119, %s120
      %p131 = scmp.eq.s32.totalorder %s22, 0
      %p132 = por %p130, %p131
      %p133 = scmp.ne.s32.totalorder %s119, %s120
      %p134 = scmp.eq.s32.totalorder %s23, 1
      %p135 = por %p133, %p134
      %p137 = scmp.ne.s32.totalorder %s120, %s136
      %p138 = scmp.eq.s32.totalorder %s23, 0
      %p139 = por %p137, %p138
      %p140 = scmp.le.s32.totalorder 1, %s17
      %p141 = scmp.lt.s32.totalorder %s17, 3
      %p142 = pnand %p140, %p141
      %p143 = pneg %p142
      // Predicated region
      $region9: #{tpu_custom_call.1} parent=5 // pred_check
        _
      $region10: #{tpu_custom_call.1} parent=5 // pred_check_branch
        %145 = sbr.rel (%p142) target = $region12
      $region11: #{tpu_custom_call.1} parent=5 // pred_region
        %s146 = ssub.s32 %s17, 1
        // Predicated region
        $region13: #{tpu_custom_call.1} parent=11 // pred_check
          %p147 = pneg %p64
        $region14: #{tpu_custom_call.1} parent=11 // pred_check_branch
          %149 = sbr.rel (%p147) target = $region16
        $region15: #{tpu_custom_call.1} parent=11 // pred_region
          %151 = vsyncadd [#allocation6], 0
          %s152 = sshll.u32 %s1, 4
          %s153 = int_to_ptr.hbm [resolvable:$true] %s152
          %s154 = sshll.u32 [#allocation5], 4
          %s155 = int_to_ptr.vmem [resolvable:$true] %s154
          %160 = dma.hbm_to_vmem [thread:$0]  %s153, 2048, %s155, [#allocation6], 64, 64, 4
        $region16: #{tpu_custom_call.1} parent=11 // pred_fallthru
          _
        // Predicated region
        $region17: #{tpu_custom_call.1} parent=11 // pred_check
          %p161 = pneg %p85
        $region18: #{tpu_custom_call.1} parent=11 // pred_check_branch
          %163 = sbr.rel (%p161) target = $region20
        $region19: #{tpu_custom_call.1} parent=11 // pred_region
          _
        $region20: #{tpu_custom_call.1} parent=11 // pred_fallthru
          _
        // Predicated region
        $region21: #{tpu_custom_call.1} parent=11 // pred_check
          %p164 = pneg %p106
        $region22: #{tpu_custom_call.1} parent=11 // pred_check_branch
          %166 = sbr.rel (%p164) target = $region24
        $region23: #{tpu_custom_call.1} parent=11 // pred_region
          _
        $region24: #{tpu_custom_call.1} parent=11 // pred_fallthru
          _
      $region12: #{tpu_custom_call.1} parent=5 // pred_fallthru
        _
      %p167 = scmp.lt.s32.totalorder %s17, 2
      // Predicated region
      $region25: #{tpu_custom_call.1} parent=5 // pred_check
        %p168 = pneg %p167
      $region26: #{tpu_custom_call.1} parent=5 // pred_check_branch
        %170 = sbr.rel (%p168) target = $region28
      $region27: #{tpu_custom_call.1} parent=5 // pred_region
        // Predicated region
        $region29: #{tpu_custom_call.1} parent=27 // pred_check
          %p171 = pneg %p37
        $region30: #{tpu_custom_call.1} parent=27 // pred_check_branch
          %173 = sbr.rel (%p171) target = $region32
        $region31: #{tpu_custom_call.1} parent=27 // pred_region
          %s174 = sand.u32 %s27, 1
          %s175 = scalar_lea.sflag [#allocation3], %s174
          %s176 = sand.u32 %s27, 1
          %s177 = smul.addr %s176, 32
          %s178 = scalar_lea.vmem [#allocation2], %s177
          %180 = vsyncadd %s175, 0
          %s181 = smul.addr %s17, 8
          %s182 = smul.addr %s181, 4
          %s183 = scalar_lea.hbm %s0, %s182
          %s184 = sshll.u32 %s183, 4
          %s185 = int_to_ptr.hbm [resolvable:$true] %s184
          %s186 = sshll.u32 %s178, 4
          %s187 = int_to_ptr.vmem [resolvable:$true] %s186
          %192 = dma.hbm_to_vmem [thread:$0]  %s185, 512, %s187, %s175, 128, 128, 8
        $region32: #{tpu_custom_call.1} parent=27 // pred_fallthru
          _
      $region28: #{tpu_custom_call.1} parent=5 // pred_fallthru
        _
      %p193 = scmp.le.s32.totalorder 1, %s17
      %p194 = scmp.lt.s32.totalorder %s17, 3
      %p195 = pnand %p193, %p194
      %p196 = pneg %p195
      // Predicated region
      $region33: #{tpu_custom_call.1} parent=5 // pred_check
        _
      $region34: #{tpu_custom_call.1} parent=5 // pred_check_branch
        %198 = sbr.rel (%p195) target = $region36
      $region35: #{tpu_custom_call.1} parent=5 // pred_region
        %s199 = ssub.s32 %s17, 1
        %s200 = sand.u32 %s30, 1
        %s201 = scalar_lea.sflag [#allocation3], %s200
        %s202 = sand.u32 %s30, 1
        %s203 = smul.addr %s202, 32
        %s204 = scalar_lea.vmem [#allocation2], %s203
        // Predicated region
        $region37: #{tpu_custom_call.1} parent=35 // pred_check
          %p205 = pneg %p43
        $region38: #{tpu_custom_call.1} parent=35 // pred_check_branch
          %207 = sbr.rel (%p205) target = $region40
        $region39: #{tpu_custom_call.1} parent=35 // pred_region
          %209 = dma.done %s201, 512
        $region40: #{tpu_custom_call.1} parent=35 // pred_fallthru
          _
        // Predicated region
        $region41: #{tpu_custom_call.1} parent=35 // pred_check
          %p210 = pneg %p64
        $region42: #{tpu_custom_call.1} parent=35 // pred_check_branch
          %212 = sbr.rel (%p210) target = $region44
        $region43: #{tpu_custom_call.1} parent=35 // pred_region
          %214 = dma.done [#allocation6], 2048
        $region44: #{tpu_custom_call.1} parent=35 // pred_fallthru
          _
        %s215 = sand.u32 %s30, 1
        %s216 = scalar_lea.sflag [#allocation3], %s215
        %s217 = sand.u32 %s30, 1
        %s218 = smul.addr %s217, 32
        %s219 = scalar_lea.vmem [#allocation2], %s218
        %p220 = pneg %p43
        %p221 = pneg %p40
        %p222 = pneg %p64
        %p223 = pneg %p61
        %p224 = pneg %p85
        %p225 = pneg %p82
        %p226 = pneg %p106
        %p227 = pneg %p103
        %p228 = pneg %p132
        %p229 = pneg %p129
        %s230 = sand.u32 %s119, 1
        %s231 = scalar_lea.sflag [#allocation4], %s230
        %s232 = sand.u32 %s119, 1
        %s233 = smul.addr %s232, 16
        %s234 = scalar_lea.vmem [#allocation7], %s233
        %v236 = vld [vmem:[%s204] sm:$0xff]
        %v237 = vld [vmem:[%s204 + $0x8] sm:$0xff]
        %v238 = vld [vmem:[%s204 + $0x10] sm:$0xff]
        %v239 = vld [vmem:[%s204 + $0x18] sm:$0xff]
        %v240 = vld [vmem:[#allocation5] sm:$0xf]
        %v241 = vld [vmem:[#allocation5 + $0x4] sm:$0xf]
        %v242 = vld [vmem:[#allocation5 + $0x8] sm:$0xf]
        %v243 = vld [vmem:[#allocation5 + $0xc] sm:$0xf]
        %v244 = vld [vmem:[#allocation5 + $0x10] sm:$0xf]
        %v245 = vld [vmem:[#allocation5 + $0x14] sm:$0xf]
        %v246 = vld [vmem:[#allocation5 + $0x18] sm:$0xf]
        %v247 = vld [vmem:[#allocation5 + $0x1c] sm:$0xf]
        %v248 = vld [vmem:[#allocation5 + $0x20] sm:$0xf]
        %v249 = vld [vmem:[#allocation5 + $0x24] sm:$0xf]
        %v250 = vld [vmem:[#allocation5 + $0x28] sm:$0xf]
        %v251 = vld [vmem:[#allocation5 + $0x2c] sm:$0xf]
        %v252 = vld [vmem:[#allocation5 + $0x30] sm:$0xf]
        %v253 = vld [vmem:[#allocation5 + $0x34] sm:$0xf]
        %v254 = vld [vmem:[#allocation5 + $0x38] sm:$0xf]
        %v255 = vld [vmem:[#allocation5 + $0x3c] sm:$0xf]
        %v256 = vld [vmem:[#allocation5 + $0x40] sm:$0xf]
        %v257 = vld [vmem:[#allocation5 + $0x44] sm:$0xf]
        %v258 = vld [vmem:[#allocation5 + $0x48] sm:$0xf]
        %v259 = vld [vmem:[#allocation5 + $0x4c] sm:$0xf]
        %v260 = vld [vmem:[#allocation5 + $0x50] sm:$0xf]
        %v261 = vld [vmem:[#allocation5 + $0x54] sm:$0xf]
        %v262 = vld [vmem:[#allocation5 + $0x58] sm:$0xf]
        %v263 = vld [vmem:[#allocation5 + $0x5c] sm:$0xf]
        %v264 = vld [vmem:[#allocation5 + $0x60] sm:$0xf]
        %v265 = vld [vmem:[#allocation5 + $0x64] sm:$0xf]
        %v266 = vld [vmem:[#allocation5 + $0x68] sm:$0xf]
        %v267 = vld [vmem:[#allocation5 + $0x6c] sm:$0xf]
        %v268 = vld [vmem:[#allocation5 + $0x70] sm:$0xf]
        %v269 = vld [vmem:[#allocation5 + $0x74] sm:$0xf]
        %v270 = vld [vmem:[#allocation5 + $0x78] sm:$0xf]
        %v271 = vld [vmem:[#allocation5 + $0x7c] sm:$0xf]
        %v276 = vunpack.c.l.b16 %v236
        %v277 = vunpack.c.h.b16 %v236
        %v278 = vunpack.c.l.b16 %v237
        %v279 = vunpack.c.h.b16 %v237
        %v280 = vunpack.c.l.b16 %v238
        %v281 = vunpack.c.h.b16 %v238
        %v282 = vunpack.c.l.b16 %v239
        %v283 = vunpack.c.h.b16 %v239
        %v284 = vpack.c.b16 %v278, %v276
        %v285 = vpack.c.b16 %v279, %v277
        %v286 = vpack.c.b16 %v282, %v280
        %v287 = vpack.c.b16 %v283, %v281
        %v324 = vunpack.c.l.b16 %v240
        %v325 = vunpack.c.l.b16 %v241
        %v326 = vunpack.c.l.b16 %v242
        %v327 = vunpack.c.l.b16 %v243
        %v328 = vunpack.c.l.b16 %v244
        %v329 = vunpack.c.l.b16 %v245
        %v330 = vunpack.c.l.b16 %v246
        %v331 = vunpack.c.l.b16 %v247
        %v332 = vunpack.c.l.b16 %v248
        %v333 = vunpack.c.l.b16 %v249
        %v334 = vunpack.c.l.b16 %v250
        %v335 = vunpack.c.l.b16 %v251
        %v336 = vunpack.c.l.b16 %v252
        %v337 = vunpack.c.l.b16 %v253
        %v338 = vunpack.c.l.b16 %v254
        %v339 = vunpack.c.l.b16 %v255
        %v340 = vunpack.c.l.b16 %v256
        %v341 = vunpack.c.l.b16 %v257
        %v342 = vunpack.c.l.b16 %v258
        %v343 = vunpack.c.l.b16 %v259
        %v344 = vunpack.c.l.b16 %v260
        %v345 = vunpack.c.l.b16 %v261
        %v346 = vunpack.c.l.b16 %v262
        %v347 = vunpack.c.l.b16 %v263
        %v348 = vunpack.c.l.b16 %v264
        %v349 = vunpack.c.l.b16 %v265
        %v350 = vunpack.c.l.b16 %v266
        %v351 = vunpack.c.l.b16 %v267
        %v352 = vunpack.c.l.b16 %v268
        %v353 = vunpack.c.l.b16 %v269
        %v354 = vunpack.c.l.b16 %v270
        %v355 = vunpack.c.l.b16 %v271
        %v356 = vpack.c.b16 %v325, %v324
        %v357 = vpack.c.b16 %v327, %v326
        %v358 = vpack.c.b16 %v329, %v328
        %v359 = vpack.c.b16 %v331, %v330
        %v360 = vpack.c.b16 %v333, %v332
        %v361 = vpack.c.b16 %v335, %v334
        %v362 = vpack.c.b16 %v337, %v336
        %v363 = vpack.c.b16 %v339, %v338
        %v364 = vpack.c.b16 %v341, %v340
        %v365 = vpack.c.b16 %v343, %v342
        %v366 = vpack.c.b16 %v345, %v344
        %v367 = vpack.c.b16 %v347, %v346
        %v368 = vpack.c.b16 %v349, %v348
        %v369 = vpack.c.b16 %v351, %v350
        %v370 = vpack.c.b16 %v353, %v352
        %v371 = vpack.c.b16 %v355, %v354
        %388 = vmatpush.bf16.msra.mxu0 %v363
        %389 = vmatpush.bf16.msra.mxu0 %v362
        %390 = vmatpush.bf16.msra.mxu0 %v361
        %391 = vmatpush.bf16.msra.mxu0 %v360
        %392 = vmatpush.bf16.msra.mxu0 %v359
        %393 = vmatpush.bf16.msra.mxu0 %v358
        %394 = vmatpush.bf16.msra.mxu0 %v357
        %395 = vmatpush.bf16.msra.mxu0 %v356
        %396 = vmatmul.bf16.gmra.mxu0 %v284
        %v397 = vpop.f32.mrf.mxu0
        %v398 = vadd.f32 0.0, %v397
        %v399 = vpop.f32.mrf.mxu0
        %v400 = vadd.f32 0.0, %v399
        %401 = vmatmul.bf16.gmra.mxu0 %v286
        %v402 = vpop.f32.mrf.mxu0
        %v403 = vadd.f32 0.0, %v402
        %v404 = vpop.f32.mrf.mxu0
        %v405 = vadd.f32 0.0, %v404
        %406 = vdwg.mxu0
        %407 = vmatpush.bf16.msra.mxu0 %v371
        %408 = vmatpush.bf16.msra.mxu0 %v370
        %409 = vmatpush.bf16.msra.mxu0 %v369
        %410 = vmatpush.bf16.msra.mxu0 %v368
        %411 = vmatpush.bf16.msra.mxu0 %v367
        %412 = vmatpush.bf16.msra.mxu0 %v366
        %413 = vmatpush.bf16.msra.mxu0 %v365
        %414 = vmatpush.bf16.msra.mxu0 %v364
        %415 = vmatmul.bf16.gmra.mxu0 %v285
        %v416 = vpop.f32.mrf.mxu0
        %v417 = vadd.f32 %v398, %v416
        %v418 = vpop.f32.mrf.mxu0
        %v419 = vadd.f32 %v400, %v418
        %420 = vmatmul.bf16.gmra.mxu0 %v287
        %v421 = vpop.f32.mrf.mxu0
        %v422 = vadd.f32 %v403, %v421
        %v423 = vpop.f32.mrf.mxu0
        %v424 = vadd.f32 %v405, %v423
        %425 = vdwg.mxu0
        %v426 = vld [vmem:[%s2] sm:$0xf]
        %v427 = vld [vmem:[%s2 + $0x4] sm:$0xf]
        %v428 = vld [vmem:[%s2 + $0x8] sm:$0xf]
        %v429 = vld [vmem:[%s2 + $0xc] sm:$0xf]
        %v430 = vpack.c.bf16 %v419, %v417
        %v431 = vpack.c.bf16 %v424, %v422
        %v432 = vld [vmem:[%s3] sm:$0xff]
        %v433 = vld [vmem:[%s3 + $0x8] sm:$0xff]
        %v434 = vld [vmem:[%s3 + $0x10] sm:$0xff]
        %v435 = vld [vmem:[%s3 + $0x18] sm:$0xff]
        %437 = vset.pattern.permute.xlu0 0
        %438 = vperm.xlu0 %437, %v432
        %v439 = vpop.permute.xlu0 %438
        %442 = vset.pattern.permute.xlu0 0
        %443 = vperm.xlu0 %442, %v433
        %v444 = vpop.permute.xlu0 %443
        %447 = vset.pattern.permute.xlu0 0
        %448 = vperm.xlu0 %447, %v434
        %v449 = vpop.permute.xlu0 %448
        %452 = vset.pattern.permute.xlu0 0
        %453 = vperm.xlu0 %452, %v435
        %v454 = vpop.permute.xlu0 %453
        %v460 = vunpack.c.l.b16 %v426
        %v461 = vunpack.c.l.b16 %v427
        %v462 = vunpack.c.l.b16 %v428
        %v463 = vunpack.c.l.b16 %v429
        %v464 = vpack.c.b16 %v461, %v460
        %v465 = vpack.c.b16 %v463, %v462
        %vm466 = vcmask 261120
        %v468 = vsel %vm466, %v464, 0
        %v471 = vsel %vm466, %v465, 0
        %473 = vmatpush.bf16.msra.mxu0 0
        %474 = vmatpush.bf16.msra.mxu0 0
        %475 = vmatpush.bf16.msra.mxu0 0
        %476 = vmatpush.bf16.msra.mxu0 0
        %477 = vmatpush.bf16.msra.mxu0 0
        %478 = vmatpush.bf16.msra.mxu0 0
        %479 = vmatpush.bf16.msra.mxu0 %v431
        %480 = vmatpush.bf16.msra.mxu0 %v430
        %481 = vmatmul.bf16.gmra.mxu0 %v468
        %v482 = vpop.f32.mrf.mxu0
        %v483 = vadd.f32 %v439, %v482
        %v484 = vpop.f32.mrf.mxu0
        %v485 = vadd.f32 %v444, %v484
        %486 = vmatmul.bf16.gmra.mxu0 %v471
        %v487 = vpop.f32.mrf.mxu0
        %v488 = vadd.f32 %v449, %v487
        %v489 = vpop.f32.mrf.mxu0
        %v490 = vadd.f32 %v454, %v489
        %491 = vdwg.mxu0
        %v492 = vpack.c.bf16 %v483, %v483
        %v493 = vpack.c.bf16 %v485, %v485
        %v494 = vpack.c.bf16 %v488, %v488
        %v495 = vpack.c.bf16 %v490, %v490
        %496 = vst [vmem:[%s234] sm:$0xf] %v492
        %497 = vst [vmem:[%s234 + $0x4] sm:$0xf] %v493
        %498 = vst [vmem:[%s234 + $0x8] sm:$0xf] %v494
        %499 = vst [vmem:[%s234 + $0xc] sm:$0xf] %v495
        %s500 = sand.u32 %s119, 1
        %s501 = scalar_lea.sflag [#allocation4], %s500
        %s502 = sand.u32 %s119, 1
        %s503 = smul.addr %s502, 16
        %s504 = scalar_lea.vmem [#allocation7], %s503
        // Predicated region
        $region45: #{tpu_custom_call.1} parent=35 // pred_check
          %p505 = pneg %p129
        $region46: #{tpu_custom_call.1} parent=35 // pred_check_branch
          %507 = sbr.rel (%p505) target = $region48
        $region47: #{tpu_custom_call.1} parent=35 // pred_region
          %509 = vsyncadd %s501, 0
          %s510 = smul.addr %s22, 4
          %s511 = smul.addr %s510, 4
          %s512 = scalar_lea.hbm %s4, %s511
          %s513 = sshll.u32 %s504, 4
          %s514 = int_to_ptr.vmem [resolvable:$true] %s513
          %s515 = sshll.u32 %s512, 4
          %s516 = int_to_ptr.hbm [resolvable:$true] %s515
          %521 = dma.vmem_to_hbm [thread:$0]  %s514, 256, %s516, %s501, 64, 64, 4
        $region48: #{tpu_custom_call.1} parent=35 // pred_fallthru
          _
      $region36: #{tpu_custom_call.1} parent=5 // pred_fallthru
        _
      %p522 = scmp.le.s32.totalorder 2, %s17
      // Predicated region
      $region49: #{tpu_custom_call.1} parent=5 // pred_check
        %p523 = pneg %p522
      $region50: #{tpu_custom_call.1} parent=5 // pred_check_branch
        %525 = sbr.rel (%p523) target = $region52
      $region51: #{tpu_custom_call.1} parent=5 // pred_region
        %s526 = ssub.s32 %s17, 2
        // Predicated region
        $region53: #{tpu_custom_call.1} parent=51 // pred_check
          %p527 = pneg %p135
        $region54: #{tpu_custom_call.1} parent=51 // pred_check_branch
          %529 = sbr.rel (%p527) target = $region56
        $region55: #{tpu_custom_call.1} parent=51 // pred_region
          %s530 = sand.u32 %s120, 1
          %s531 = scalar_lea.sflag [#allocation4], %s530
          %s532 = sand.u32 %s120, 1
          %s533 = smul.addr %s532, 16
          %s534 = scalar_lea.vmem [#allocation7], %s533
          %536 = dma.done %s531, 256
        $region56: #{tpu_custom_call.1} parent=51 // pred_fallthru
          _
      $region52: #{tpu_custom_call.1} parent=5 // pred_fallthru
        _
    $region6: #{tpu_custom_call.1} parent=1 // loop_footer
      %s21 = sadd.s32 1, %s17
    $region7: #{tpu_custom_call.1} parent=1 // loop_footer_branch
      %16 = sbr.rel target = $region3
    $region8: #{tpu_custom_call.1} parent=1 // loop_exit
      _
    %537 = vsyncpa [#allocation3], 1
    %s538 = scalar_lea.sflag [#allocation3], 1
    %539 = vsyncpa %s538, 1
    %540 = vsyncpa [#allocation6], 1
    %541 = vsyncpa [#allocation4], 1
    %s542 = scalar_lea.sflag [#allocation4], 1
    %543 = vsyncpa %s542, 1

</llo_original>
